<compile_context>
chip_gen: v6e
topology: v6e:2x2x1
jax: 0.10.0
libtpu: 0.0.40
codegen_flags: <defaults>
</compile_context>

<pallas_src>
import functools

import jax
import jax.numpy as jnp
from jax.experimental import pallas as pl
from jax.experimental.pallas import tpu as pltpu


# ----------------------------------------------------------------------------
# Generation-aware elementwise dtype: bf16 VPU/EUP on v6e/v7x, f32 on v5e/older.
# ----------------------------------------------------------------------------
def _elementwise_dtype_for_device():
    try:
        kind = jax.devices()[0].device_kind.lower()
    except Exception:
        return jnp.float32
    return jnp.bfloat16 if ("v6" in kind or "v7" in kind) else jnp.float32


# ----------------------------------------------------------------------------
# Fused kernel: inner model forward (both CFG branches) + CFG combine
# ----------------------------------------------------------------------------
def _fused_cfg_kernel(s_ref, x_ref, tbias_ref, cbias_ref,
                      win_ref, wout_ref, bout_ref, out_ref, *, compute_dtype):
    tb, tt, d = x_ref.shape
    h_dim = win_ref.shape[1]

    s = s_ref[0].astype(compute_dtype)              # CFG scale s
    one_minus_s = s_ref[1].astype(compute_dtype)    # precomputed (1 - s)

    # Shared first matmul — cond and uncond branches see identical x.
    # x arrives bf16 (cast upstream); accumulate in f32 on the MXU.
    x2d = x_ref[...].reshape(tb * tt, d)                       # (tb*tt, D) bf16
    h = jnp.dot(x2d, win_ref[...], preferred_element_type=jnp.float32)
    h = h.reshape(tb, tt, h_dim)                               # (tb, tt, H) f32

    # Per-batch-row hoisted biases: (b_in + t_emb@W_t) and (cond@W_c).
    h_u_pre = h + tbias_ref[...]                               # (tb,1,H) bcast
    h_c_pre = h_u_pre + cbias_ref[...]

    # TODO(synk): jax.nn.gelu defaults to the tanh approximation; PyTorch
    # nn.GELU defaults to exact erf — tiny numerical difference vs. torch.
    h_u = jax.nn.gelu(h_u_pre.astype(compute_dtype))   # uncond: cond proj == 0 exactly
    h_c = jax.nn.gelu(h_c_pre.astype(compute_dtype))   # cond:   + cond @ W_c

    # CFG combine in hidden space (output head is linear, bias shared):
    #   s*out_c + (1-s)*out_u == (s*h_c + (1-s)*h_u) @ W_out + b_out
    h_mix = h_c * s + h_u * one_minus_s

    y = jnp.dot(h_mix.reshape(tb * tt, h_dim).astype(jnp.bfloat16), wout_ref[...],
                preferred_element_type=jnp.float32)            # (tb*tt, D) f32
    y = y.reshape(tb, tt, d) + bout_ref[...]
    out_ref[...] = y.astype(out_ref.dtype)


# ----------------------------------------------------------------------------
# Tiling: >= rows_per_step rows per grid step (amortize ~0.35us/step, long DMAs)
# while keeping >= 2 grid steps when possible (both v7x TensorCores busy).
# ----------------------------------------------------------------------------
def _choose_tiles(B, T, rows_per_step):
    if T >= rows_per_step:
        tile_b, tile_t = 1, rows_per_step
        while T % tile_t:
            tile_t //= 2
    else:
        tile_t = T
        tile_b = max(1, min(B, rows_per_step // T))
        while B % tile_b:
            tile_b -= 1
    if B // tile_b == 1 and T // tile_t == 1:          # guarantee >= 2 parallel steps
        if tile_b > 1:
            tile_b //= 2
            while B % tile_b:
                tile_b -= 1
        elif tile_t % 32 == 0:
            tile_t //= 2
    return tile_b, tile_t


def cfg_denoiser_forward(params, s, x, t_bias, c_bias, *,
                         rows_per_step=1024,
                         out_dtype=jnp.bfloat16,
                         compute_dtype=None):
    """x: (B,T,D); t_bias/c_bias: (B,H) precomputed row biases -> (B,T,D)."""
    B, T, D = x.shape
    H = params["w_in"].shape[1]
    if compute_dtype is None:
        compute_dtype = _elementwise_dtype_for_device()

    tile_b, tile_t = _choose_tiles(B, T, rows_per_step)
    assert B % tile_b == 0 and T % tile_t == 0
    assert tile_t == T or tile_t % 8 == 0, "partial T-tiles must be sublane-aligned"

    # bf16 MXU feed: cast upstream (halves x HBM bytes, no in-kernel cast).
    if x.dtype != jnp.bfloat16:
        x = x.astype(jnp.bfloat16)

    s32 = jnp.float32(s)
    s_arr = jnp.stack([s32, 1.0 - s32])                # SMEM [s, 1-s]
    t_bias3 = t_bias.reshape(B, 1, H).astype(jnp.float32)
    c_bias3 = c_bias.reshape(B, 1, H).astype(jnp.float32)

    grid = (B // tile_b, T // tile_t)

    # Constant operands never change block index. At production D/H (v7x: 64 MiB
    # VMEM) single-buffer them; at demo sizes double-buffering them is already
    # a rounding error, keep the vanilla spec.
    w_bytes = int(params["w_in"].size * params["w_in"].dtype.itemsize
                  + params["w_out"].size * params["w_out"].dtype.itemsize
                  + params["b_out"].size * params["b_out"].dtype.itemsize)
    if w_bytes > (2 << 20):
        const_spec = lambda shape: pl.BlockSpec(
            shape, lambda b, t: (0,) * len(shape), pipeline_mode=pl.Buffered(1))
    else:
        const_spec = lambda shape: pl.BlockSpec(shape, lambda b, t: (0,) * len(shape))

    # Advisory cost estimate for XLA scheduling around the custom call.
    out_itemsize = jnp.dtype(out_dtype).itemsize
    bytes_accessed = int(x.size * 2 + B * T * D * out_itemsize + w_bytes
                         + t_bias3.size * 4 + c_bias3.size * 4 + s_arr.size * 4)
    cost = pl.CostEstimate(flops=4 * B * T * D * H,
                           transcendentals=2 * B * T * H,
                           bytes_accessed=bytes_accessed)

    # Only override the scoped-VMEM budget when the working set may not fit the
    # conservative default (production sizes); demo sizes leave it untouched.
    est_vmem = (2 * tile_b * tile_t * D * (2 + out_itemsize)      # x + out, 2-buffered
                + 2 * w_bytes + 2 * 2 * tile_b * H * 4)
    compiler_kwargs = {}
    if est_vmem > (12 << 20):
        compiler_kwargs["vmem_limit_bytes"] = min(int(est_vmem * 2), 100 << 20)

    kernel = functools.partial(_fused_cfg_kernel, compute_dtype=compute_dtype)

    return pl.pallas_call(
        kernel,
        out_shape=jax.ShapeDtypeStruct((B, T, D), out_dtype),
        grid=grid,
        in_specs=[
            pl.BlockSpec(memory_space=pltpu.MemorySpace.SMEM),            # [s, 1-s]
            pl.BlockSpec((tile_b, tile_t, D), lambda b, t: (b, t, 0)),    # x tile (bf16)
            pl.BlockSpec((tile_b, 1, H), lambda b, t: (b, 0, 0)),         # t_bias rows
            pl.BlockSpec((tile_b, 1, H), lambda b, t: (b, 0, 0)),         # c_bias rows
            const_spec((D, H)),                                           # W_in  (bf16)
            const_spec((H, D)),                                           # W_out (bf16)
            const_spec((1, D)),                                           # b_out (f32)
        ],
        out_specs=pl.BlockSpec((tile_b, tile_t, D), lambda b, t: (b, t, 0)),
        compiler_params=pltpu.CompilerParams(
            dimension_semantics=("parallel", "parallel"), **compiler_kwargs),
        cost_estimate=cost,
    )(s_arr, x, t_bias3, c_bias3, params["w_in"], params["w_out"], params["b_out"])


# ----------------------------------------------------------------------------
# Glue: sinusoidal timestep embedding + the CFG sampler wrapper
# ----------------------------------------------------------------------------
def timestep_embedding(t, dim):
    half = dim // 2
    freqs = jnp.exp(-jnp.log(10000.0) * jnp.arange(half, dtype=jnp.float32) / half)
    args = t.astype(jnp.float32)[:, None] * freqs[None, :]
    return jnp.concatenate([jnp.cos(args), jnp.sin(args)], axis=-1)   # (B, dim)


class ClassifierFreeSampleModel:
    """JAX/Pallas port of the PyTorch ClassifierFreeSampleModel."""

    def __init__(self, model_params, cfg_scale):
        self.params = model_params
        self.s = float(cfg_scale)

    def __call__(self, x, timesteps, cond=None, mask=None,
                 motion_guidance=None, spatial_condition=None):
        B, T, D = x.shape
        H = self.params["w_in"].shape[1]
        DT = self.params["w_t"].shape[0]

        # The PyTorch module doubles the batch ([x;x],[t;t],[cond;0]) and runs
        # the model once on 2B rows. Both halves share x and timesteps, so we
        # skip the doubling and evaluate both branches per row inside the fused
        # kernel (the uncond branch's cond-projection is exactly 0).
        tfeat = timestep_embedding(timesteps, DT)                      # (B, DT)
        t_bias = self.params["b_in"] + tfeat @ self.params["w_t"]      # (B, H) hoisted
        if cond is not None:
            c_bias = cond.astype(jnp.float32) @ self.params["w_c"]     # (B, H) hoisted
        else:
            c_bias = jnp.zeros((B, H), jnp.float32)                    # cond == uncond

        # TODO(synk): mask / motion_guidance / spatial_condition are duplicated
        # identically for both branches in the reference module; the synthetic
        # inner model does not consume them, so the duplication is a no-op here.
        return cfg_denoiser_forward(self.params, self.s, x, t_bias, c_bias)


# ----------------------------------------------------------------------------
# Pure-JAX reference: literal port of the module semantics (batch doubling,
# combine in output space), same bf16 matmul operands, f32 elementwise.
# ----------------------------------------------------------------------------
def _reference_forward(params, s, x, timesteps, cond):
    B = x.shape[0]
    DT = params["w_t"].shape[0]
    x2 = jnp.concatenate([x, x], 0)
    t2 = jnp.concatenate([timesteps, timesteps], 0)
    c2 = jnp.concatenate([cond, jnp.zeros_like(cond)], 0)
    tf = timestep_embedding(t2, DT)
    row_bias = params["b_in"] + tf @ params["w_t"] + c2 @ params["w_c"]   # (2B, H)
    h = jnp.einsum("btd,dh->bth", x2.astype(jnp.bfloat16), params["w_in"],
                   preferred_element_type=jnp.float32) + row_bias[:, None, :]
    h = jax.nn.gelu(h)
    out = jnp.einsum("bth,hd->btd", h.astype(jnp.bfloat16), params["w_out"],
                     preferred_element_type=jnp.float32) + params["b_out"]
    return s * out[:B] + (1.0 - s) * out[B:]


# ----------------------------------------------------------------------------
if __name__ == "__main__":
    # Lane-dense, MXU-friendly demo shapes: D = H = 128. B=4, T=16 exercises the
    # batch-blocked tiling (tile_b=2, 2 parallel grid steps, 32 rows per step).
    B, T, D = 4, 16, 128
    H, DT, DC = 128, 64, 32
    cfg_scale = 2.5

    key = jax.random.PRNGKey(0)
    kx, kc, kp = jax.random.split(key, 3)
    pk = jax.random.split(kp, 6)

    params = {
        # MXU-facing weights stored bf16 (native MXU dtype, half the DMA bytes).
        "w_in":  (jax.random.normal(pk[0], (D, H), jnp.float32) * 0.05).astype(jnp.bfloat16),
        "w_out": (jax.random.normal(pk[3], (H, D), jnp.float32) * 0.05).astype(jnp.bfloat16),
        # Small projections / biases stay f32 (hoisted precompute + VPU adds).
        "b_in":  jax.random.normal(pk[4], (1, H), jnp.float32) * 0.05,
        "w_t":   jax.random.normal(pk[1], (DT, H), jnp.float32) * 0.05,
        "w_c":   jax.random.normal(pk[2], (DC, H), jnp.float32) * 0.05,
        "b_out": jax.random.normal(pk[5], (1, D), jnp.float32) * 0.05,
    }

    x = jax.random.normal(kx, (B, T, D), jnp.float32)
    timesteps = jnp.array([7, 42, 123, 999], dtype=jnp.int32)      # (B,)
    cond = jax.random.normal(kc, (B, DC), jnp.float32)

    sampler = ClassifierFreeSampleModel(params, cfg_scale)
    run = jax.jit(lambda x_, t_, c_: sampler(x_, t_, cond=c_))
    out = jax.block_until_ready(run(x, timesteps, cond))

    ref = _reference_forward(params, cfg_scale, x, timesteps, cond)
    assert out.shape == (B, T, D)

    # bf16 output (+ bf16 elementwise on v6e/v7x) vs an f32-combine reference:
    # aggregate relative error should stay ~1%, elementwise deviations ~1e-2.
    diff = out.astype(jnp.float32) - ref
    rel_l2 = float(jnp.linalg.norm(diff) / (jnp.linalg.norm(ref) + 1e-12))
    max_abs = float(jnp.max(jnp.abs(diff)))
    assert rel_l2 < 2e-2, f"relative L2 error too large: {rel_l2}"
    assert max_abs < 6e-2, f"max abs error too large: {max_abs}"

    print("KERNEL_OK")
</pallas_src>

<mosaic_0001>
module attributes {stable_mosaic.version = 11 : i64} {
  func.func @_fused_cfg_kernel(%arg0: i32, %arg1: i32, %arg2: memref<2xf32, #tpu.memory_space<smem>>, %arg3: memref<2x16x128xbf16, #tpu.memory_space<vmem>>, %arg4: memref<2x1x128xf32, #tpu.memory_space<vmem>>, %arg5: memref<2x1x128xf32, #tpu.memory_space<vmem>>, %arg6: memref<128x128xbf16, #tpu.memory_space<vmem>>, %arg7: memref<128x128xbf16, #tpu.memory_space<vmem>>, %arg8: memref<1x128xf32, #tpu.memory_space<vmem>>, %arg9: memref<2x16x128xbf16, #tpu.memory_space<vmem>>) attributes {dimension_semantics = [#tpu.dimension_semantics<parallel>, #tpu.dimension_semantics<parallel>], iteration_bounds = array<i64: 2, 1>, scalar_prefetch = 0 : i64, scratch_operands = 0 : i64, tpu.core_type = #tpu.core_type<tc>, window_params = [{transform_indices = @transform_0, window_bounds = array<i64: 2>}, {transform_indices = @transform_1, window_bounds = array<i64: 2, 16, 128>}, {transform_indices = @transform_2, window_bounds = array<i64: 2, 1, 128>}, {transform_indices = @transform_3, window_bounds = array<i64: 2, 1, 128>}, {pipeline_mode = #tpu.pipeline_mode<synchronous>, transform_indices = @transform_4, window_bounds = array<i64: 128, 128>}, {pipeline_mode = #tpu.pipeline_mode<synchronous>, transform_indices = @transform_5, window_bounds = array<i64: 128, 128>}, {pipeline_mode = #tpu.pipeline_mode<synchronous>, transform_indices = @transform_6, window_bounds = array<i64: 1, 128>}, {transform_indices = @transform_7, window_bounds = array<i64: 2, 16, 128>}]} {
    %c0 = arith.constant 0 : index
    %0 = memref.load %arg2[%c0] : memref<2xf32, #tpu.memory_space<smem>>
    %c1 = arith.constant 1 : index
    %1 = memref.load %arg2[%c1] : memref<2xf32, #tpu.memory_space<smem>>
    %c0_0 = arith.constant 0 : index
    %c0_1 = arith.constant 0 : index
    %c0_2 = arith.constant 0 : index
    %2 = vector.load %arg3[%c0_0, %c0_1, %c0_2] : memref<2x16x128xbf16, #tpu.memory_space<vmem>>, vector<2x16x128xbf16>
    %3 = vector.shape_cast %2 : vector<2x16x128xbf16> to vector<32x128xbf16>
    %c0_3 = arith.constant 0 : index
    %c0_4 = arith.constant 0 : index
    %4 = vector.load %arg6[%c0_3, %c0_4] : memref<128x128xbf16, #tpu.memory_space<vmem>>, vector<128x128xbf16>
    %cst = arith.constant dense<0.000000e+00> : vector<32x128xf32>
    %5 = tpu.matmul %3, %4, %cst {dimension_numbers = #tpu.dot_dimension_numbers<[1], [0], [0], [1], [0, 0, 1, 1], [], []>} : vector<32x128xbf16>, vector<128x128xbf16>, vector<32x128xf32> -> vector<32x128xf32>
    %6 = vector.shape_cast %5 : vector<32x128xf32> to vector<2x16x128xf32>
    %c0_5 = arith.constant 0 : index
    %c0_6 = arith.constant 0 : index
    %c0_7 = arith.constant 0 : index
    %7 = vector.load %arg4[%c0_5, %c0_6, %c0_7] : memref<2x1x128xf32, #tpu.memory_space<vmem>>, vector<2x1x128xf32>
    %8 = vector.broadcast %7 : vector<2x1x128xf32> to vector<2x16x128xf32>
    %9 = arith.addf %6, %8 : vector<2x16x128xf32>
    %c0_8 = arith.constant 0 : index
    %c0_9 = arith.constant 0 : index
    %c0_10 = arith.constant 0 : index
    %10 = vector.load %arg5[%c0_8, %c0_9, %c0_10] : memref<2x1x128xf32, #tpu.memory_space<vmem>>, vector<2x1x128xf32>
    %11 = vector.broadcast %10 : vector<2x1x128xf32> to vector<2x16x128xf32>
    %12 = arith.addf %9, %11 : vector<2x16x128xf32>
    %13 = arith.mulf %9, %9 : vector<2x16x128xf32>
    %14 = arith.mulf %9, %13 : vector<2x16x128xf32>
    %cst_11 = arith.constant 4.471500e-02 : f32
    %15 = vector.broadcast %cst_11 : f32 to vector<2x16x128xf32>
    %16 = arith.mulf %15, %14 : vector<2x16x128xf32>
    %17 = arith.addf %9, %16 : vector<2x16x128xf32>
    %cst_12 = arith.constant 0.797884583 : f32
    %18 = vector.broadcast %cst_12 : f32 to vector<2x16x128xf32>
    %19 = arith.mulf %18, %17 : vector<2x16x128xf32>
    %20 = math.tanh %19 : vector<2x16x128xf32>
    %cst_13 = arith.constant 1.000000e+00 : f32
    %21 = vector.broadcast %cst_13 : f32 to vector<2x16x128xf32>
    %22 = arith.addf %21, %20 : vector<2x16x128xf32>
    %cst_14 = arith.constant 5.000000e-01 : f32
    %23 = vector.broadcast %cst_14 : f32 to vector<2x16x128xf32>
    %24 = arith.mulf %23, %22 : vector<2x16x128xf32>
    %25 = arith.mulf %9, %24 : vector<2x16x128xf32>
    %26 = arith.mulf %12, %12 : vector<2x16x128xf32>
    %27 = arith.mulf %12, %26 : vector<2x16x128xf32>
    %cst_15 = arith.constant 4.471500e-02 : f32
    %28 = vector.broadcast %cst_15 : f32 to vector<2x16x128xf32>
    %29 = arith.mulf %28, %27 : vector<2x16x128xf32>
    %30 = arith.addf %12, %29 : vector<2x16x128xf32>
    %cst_16 = arith.constant 0.797884583 : f32
    %31 = vector.broadcast %cst_16 : f32 to vector<2x16x128xf32>
    %32 = arith.mulf %31, %30 : vector<2x16x128xf32>
    %33 = math.tanh %32 : vector<2x16x128xf32>
    %cst_17 = arith.constant 1.000000e+00 : f32
    %34 = vector.broadcast %cst_17 : f32 to vector<2x16x128xf32>
    %35 = arith.addf %34, %33 : vector<2x16x128xf32>
    %cst_18 = arith.constant 5.000000e-01 : f32
    %36 = vector.broadcast %cst_18 : f32 to vector<2x16x128xf32>
    %37 = arith.mulf %36, %35 : vector<2x16x128xf32>
    %38 = arith.mulf %12, %37 : vector<2x16x128xf32>
    %39 = vector.broadcast %0 : f32 to vector<2x16x128xf32>
    %40 = arith.mulf %38, %39 : vector<2x16x128xf32>
    %41 = vector.broadcast %1 : f32 to vector<2x16x128xf32>
    %42 = arith.mulf %25, %41 : vector<2x16x128xf32>
    %43 = arith.addf %40, %42 : vector<2x16x128xf32>
    %44 = vector.shape_cast %43 : vector<2x16x128xf32> to vector<32x128xf32>
    %45 = arith.truncf %44 : vector<32x128xf32> to vector<32x128xbf16>
    %c0_19 = arith.constant 0 : index
    %c0_20 = arith.constant 0 : index
    %46 = vector.load %arg7[%c0_19, %c0_20] : memref<128x128xbf16, #tpu.memory_space<vmem>>, vector<128x128xbf16>
    %cst_21 = arith.constant dense<0.000000e+00> : vector<32x128xf32>
    %47 = tpu.matmul %45, %46, %cst_21 {dimension_numbers = #tpu.dot_dimension_numbers<[1], [0], [0], [1], [0, 0, 1, 1], [], []>} : vector<32x128xbf16>, vector<128x128xbf16>, vector<32x128xf32> -> vector<32x128xf32>
    %48 = vector.shape_cast %47 : vector<32x128xf32> to vector<2x16x128xf32>
    %c0_22 = arith.constant 0 : index
    %c0_23 = arith.constant 0 : index
    %49 = vector.load %arg8[%c0_22, %c0_23] : memref<1x128xf32, #tpu.memory_space<vmem>>, vector<1x128xf32>
    %50 = vector.shape_cast %49 : vector<1x128xf32> to vector<1x1x128xf32>
    %51 = vector.broadcast %50 : vector<1x1x128xf32> to vector<2x16x128xf32>
    %52 = arith.addf %48, %51 : vector<2x16x128xf32>
    %53 = arith.truncf %52 : vector<2x16x128xf32> to vector<2x16x128xbf16>
    %c0_24 = arith.constant 0 : index
    %c0_25 = arith.constant 0 : index
    %c0_26 = arith.constant 0 : index
    %54 = vector.load %arg9[%c0_24, %c0_25, %c0_26] : memref<2x16x128xbf16, #tpu.memory_space<vmem>>, vector<2x16x128xbf16>
    tpu.vector_store %arg9[%c0_24, %c0_25, %c0_26], %53 {strides = array<i32>} : memref<2x16x128xbf16, #tpu.memory_space<vmem>>, vector<2x16x128xbf16>,
    return
  }
  func.func @transform_0(%arg0: i32, %arg1: i32) -> i32 {
    %c0_i32 = arith.constant 0 : i32
    %c0_i32_0 = arith.constant 0 : i32
    return %c0_i32 : i32
  }
  func.func @transform_1(%arg0: i32, %arg1: i32) -> (i32, i32, i32) {
    %c0_i32 = arith.constant 0 : i32
    %c0_i32_0 = arith.constant 0 : i32
    return %arg0, %arg1, %c0_i32 : i32, i32, i32
  }
  func.func @transform_2(%arg0: i32, %arg1: i32) -> (i32, i32, i32) {
    %c0_i32 = arith.constant 0 : i32
    %c0_i32_0 = arith.constant 0 : i32
    %c0_i32_1 = arith.constant 0 : i32
    return %arg0, %c0_i32, %c0_i32_0 : i32, i32, i32
  }
  func.func @transform_3(%arg0: i32, %arg1: i32) -> (i32, i32, i32) {
    %c0_i32 = arith.constant 0 : i32
    %c0_i32_0 = arith.constant 0 : i32
    %c0_i32_1 = arith.constant 0 : i32
    return %arg0, %c0_i32, %c0_i32_0 : i32, i32, i32
  }
  func.func @transform_4(%arg0: i32, %arg1: i32) -> (i32, i32) {
    %c0_i32 = arith.constant 0 : i32
    %c0_i32_0 = arith.constant 0 : i32
    %c0_i32_1 = arith.constant 0 : i32
    return %c0_i32, %c0_i32_0 : i32, i32
  }
  func.func @transform_5(%arg0: i32, %arg1: i32) -> (i32, i32) {
    %c0_i32 = arith.constant 0 : i32
    %c0_i32_0 = arith.constant 0 : i32
    %c0_i32_1 = arith.constant 0 : i32
    return %c0_i32, %c0_i32_0 : i32, i32
  }
  func.func @transform_6(%arg0: i32, %arg1: i32) -> (i32, i32) {
    %c0_i32 = arith.constant 0 : i32
    %c0_i32_0 = arith.constant 0 : i32
    %c0_i32_1 = arith.constant 0 : i32
    return %c0_i32, %c0_i32_0 : i32, i32
  }
  func.func @transform_7(%arg0: i32, %arg1: i32) -> (i32, i32, i32) {
    %c0_i32 = arith.constant 0 : i32
    %c0_i32_0 = arith.constant 0 : i32
    return %arg0, %arg1, %c0_i32 : i32, i32, i32
  }
}

</mosaic_0001>

<llo_original>
// kernel: _lambda_.1
$region0: #{_lambda_.1}
  #allocation0 [shape = 'u32[]', space=smem, size = 0x4, offset = 0x4, fixed_abs, tag = 'smem constant byte address 0x4 - core index']
  #allocation1 [shape = 'u32[144,128]{1,0:T(1,128)}', space=vmem, size = 0x12000, scoped, tag = 'internal scratch']
  %s0 = inlined_call_operand.vmem [shape: f32[2], index: 0, kind: input, shape index: {}]
  %s1 = inlined_call_operand.vmem [shape: bf16[4,16,128], index: 1, kind: input, shape index: {}]
  %s2 = inlined_call_operand.vmem [shape: f32[4,1,128], index: 2, kind: input, shape index: {}]
  %s3 = inlined_call_operand.vmem [shape: f32[4,1,128], index: 3, kind: input, shape index: {}]
  %s4 = inlined_call_operand.vmem [shape: bf16[128,128], index: 4, kind: input, shape index: {}]
  %s5 = inlined_call_operand.vmem [shape: bf16[128,128], index: 5, kind: input, shape index: {}]
  %s6 = inlined_call_operand.vmem [shape: f32[1,128], index: 6, kind: input, shape index: {}]
  %s7 = inlined_call_operand.hbm [shape: bf16[4,16,128], index: 7, kind: output, shape index: {}]
  %s8 = sld [smem:[#allocation0]]
  $region65: #{_lambda_.1} parent=0
    _
  %s10 = ssub.s32 1, %s8
  %s11 = scalar_select 0, %s10, %s8
  $region1: #{_lambda_.1} parent=0
    #allocation2 [shape = 'u8[512]{0}', space=smem, size = 0x200, scoped, tag = 'input window, operand 0, single buffered']
    #allocation3 [shape = 's32[2]{0}', space=sflag, size = 0x8, scoped, tag = 'scoped memory for _lambda_.1']
    #allocation4 [shape = 's32[2]{0}', space=sflag, size = 0x8, scoped, tag = 'scoped memory for _lambda_.1']
    #allocation5 [shape = 'u8[16384]{0}', space=vmem, size = 0x4000, scoped, tag = 'output window, operand 0']
    %12 = vsyncpa [#allocation4], 0
    %13 = vsyncpa [#allocation3], 0
    %s14 = scalar_lea.sflag [#allocation3], 1
    %15 = vsyncpa %s14, 0
    loop: start=0, step=1, limit=4
    $region2: #{_lambda_.1} parent=1 // loop_pre_header
      _
    $region3: #{_lambda_.1} parent=1 // loop_header
      %s17 = sphi 0, %s21
      %p18 = scmp.ge.s32.totalorder %s17, 4
      %s24 = sphi 0, %s36
      %s25 = sphi 0, %s32
      %s26 = sphi 0, %s24
      %s27 = sphi 0, %s25
      %s28 = sphi 0, %s26
      %s29 = sphi 0, %s27
      %s37 = sphi 0, %s37
      %s39 = sphi 0, %s37
      %s40 = sphi 0, %s39
      %s54 = sphi 0, %s40
      %s62 = sphi 0, %s64
      %s65 = sphi 0, %s62
      %s66 = sphi 0, %s65
      %s82 = sphi 0, %s66
      %s88 = sphi 0, %s90
      %s91 = sphi 0, %s88
      %s92 = sphi 0, %s91
      %s108 = sphi 0, %s92
      %s114 = sphi 0, %s116
      %s117 = sphi 0, %s114
      %s118 = sphi 0, %s117
      %s134 = sphi 0, %s118
      %s138 = sphi 0, %s138
      %s140 = sphi 0, %s138
      %s141 = sphi 0, %s140
      %s155 = sphi 0, %s141
      %s159 = sphi 0, %s159
      %s161 = sphi 0, %s159
      %s162 = sphi 0, %s161
      %s176 = sphi 0, %s162
      %s180 = sphi 0, %s180
      %s182 = sphi 0, %s180
      %s183 = sphi 0, %s182
      %s197 = sphi 0, %s183
      %s205 = sphi 0, %s207
      %s208 = sphi 0, %s205
      %s209 = sphi 0, %s208
      %s225 = sphi 0, %s209
    $region4: #{_lambda_.1} parent=1 // loop_header_branch
      %20 = sbr.rel (%p18) target = $region8
    $region5: #{_lambda_.1} parent=1 // loop_body
      %s22 = ssub.s32 %s17, 1
      %s23 = ssub.s32 %s17, 2
      %s30 = sadd.s32 1, %s25
      %p31 = scmp.ge.s32.totalorder %s30, 1
      %s32 = scalar_select %p31, 0, %s30
      %s33 = sadd.s32 1, %s24
      %s34 = scalar_select %p31, %s33, %s24
      %p35 = scmp.ge.s32.totalorder %s34, 2
      %s36 = scalar_select %p35, 0, %s34
      %s38 = sadd.s32 %s37, 1
      %p41 = scmp.eq.s32.totalorder %s17, 1
      %p42 = scmp.ne.s32.totalorder %s37, %s39
      %p43 = scmp.eq.s32.totalorder %s17, 0
      %p44 = por %p42, %p43
      %p45 = scmp.ne.s32.totalorder %s37, %s39
      %p46 = scmp.eq.s32.totalorder %s22, 1
      %p47 = por %p45, %p46
      %p48 = scmp.ne.s32.totalorder %s39, %s40
      %p49 = scmp.eq.s32.totalorder %s22, 0
      %p50 = por %p48, %p49
      %p51 = scmp.ne.s32.totalorder %s39, %s40
      %p52 = scmp.eq.s32.totalorder %s23, 1
      %p53 = por %p51, %p52
      %p55 = scmp.ne.s32.totalorder %s40, %s54
      %p56 = scmp.eq.s32.totalorder %s23, 0
      %p57 = por %p55, %p56
      %s58 = ssub.s32 %s24, %s36
      %s59 = ssub.s32 %s25, %s32
      %s60 = sor.u32 %s58, %s59
      %p61 = scmp.eq.s32.totalorder %s60, 0
      %s63 = sadd.s32 %s62, 1
      %s64 = scalar_select %p61, %s62, %s63
      %p67 = pneg %p61
      %p68 = scmp.eq.s32.totalorder %s17, 1
      %p69 = por %p67, %p68
      %p70 = scmp.ne.s32.totalorder %s62, %s65
      %p71 = scmp.eq.s32.totalorder %s17, 0
      %p72 = por %p70, %p71
      %p73 = scmp.ne.s32.totalorder %s62, %s65
      %p74 = scmp.eq.s32.totalorder %s22, 1
      %p75 = por %p73, %p74
      %p76 = scmp.ne.s32.totalorder %s65, %s66
      %p77 = scmp.eq.s32.totalorder %s22, 0
      %p78 = por %p76, %p77
      %p79 = scmp.ne.s32.totalorder %s65, %s66
      %p80 = scmp.eq.s32.totalorder %s23, 1
      %p81 = por %p79, %p80
      %p83 = scmp.ne.s32.totalorder %s66, %s82
      %p84 = scmp.eq.s32.totalorder %s23, 0
      %p85 = por %p83, %p84
      %s86 = ssub.s32 %s24, %s36
      %p87 = scmp.eq.s32.totalorder %s86, 0
      %s89 = sadd.s32 %s88, 1
      %s90 = scalar_select %p87, %s88, %s89
      %p93 = pneg %p87
      %p94 = scmp.eq.s32.totalorder %s17, 1
      %p95 = por %p93, %p94
      %p96 = scmp.ne.s32.totalorder %s88, %s91
      %p97 = scmp.eq.s32.totalorder %s17, 0
      %p98 = por %p96, %p97
      %p99 = scmp.ne.s32.totalorder %s88, %s91
      %p100 = scmp.eq.s32.totalorder %s22, 1
      %p101 = por %p99, %p100
      %p102 = scmp.ne.s32.totalorder %s91, %s92
      %p103 = scmp.eq.s32.totalorder %s22, 0
      %p104 = por %p102, %p103
      %p105 = scmp.ne.s32.totalorder %s91, %s92
      %p106 = scmp.eq.s32.totalorder %s23, 1
      %p107 = por %p105, %p106
      %p109 = scmp.ne.s32.totalorder %s92, %s108
      %p110 = scmp.eq.s32.totalorder %s23, 0
      %p111 = por %p109, %p110
      %s112 = ssub.s32 %s24, %s36
      %p113 = scmp.eq.s32.totalorder %s112, 0
      %s115 = sadd.s32 %s114, 1
      %s116 = scalar_select %p113, %s114, %s115
      %p119 = pneg %p113
      %p120 = scmp.eq.s32.totalorder %s17, 1
      %p121 = por %p119, %p120
      %p122 = scmp.ne.s32.totalorder %s114, %s117
      %p123 = scmp.eq.s32.totalorder %s17, 0
      %p124 = por %p122, %p123
      %p125 = scmp.ne.s32.totalorder %s114, %s117
      %p126 = scmp.eq.s32.totalorder %s22, 1
      %p127 = por %p125, %p126
      %p128 = scmp.ne.s32.totalorder %s117, %s118
      %p129 = scmp.eq.s32.totalorder %s22, 0
      %p130 = por %p128, %p129
      %p131 = scmp.ne.s32.totalorder %s117, %s118
      %p132 = scmp.eq.s32.totalorder %s23, 1
      %p133 = por %p131, %p132
      %p135 = scmp.ne.s32.totalorder %s118, %s134
      %p136 = scmp.eq.s32.totalorder %s23, 0
      %p137 = por %p135, %p136
      %s139 = sadd.s32 %s138, 1
      %p142 = scmp.eq.s32.totalorder %s17, 1
      %p143 = scmp.ne.s32.totalorder %s138, %s140
      %p144 = scmp.eq.s32.totalorder %s17, 0
      %p145 = por %p143, %p144
      %p146 = scmp.ne.s32.totalorder %s138, %s140
      %p147 = scmp.eq.s32.totalorder %s22, 1
      %p148 = por %p146, %p147
      %p149 = scmp.ne.s32.totalorder %s140, %s141
      %p150 = scmp.eq.s32.totalorder %s22, 0
      %p151 = por %p149, %p150
      %p152 = scmp.ne.s32.totalorder %s140, %s141
      %p153 = scmp.eq.s32.totalorder %s23, 1
      %p154 = por %p152, %p153
      %p156 = scmp.ne.s32.totalorder %s141, %s155
      %p157 = scmp.eq.s32.totalorder %s23, 0
      %p158 = por %p156, %p157
      %s160 = sadd.s32 %s159, 1
      %p163 = scmp.eq.s32.totalorder %s17, 1
      %p164 = scmp.ne.s32.totalorder %s159, %s161
      %p165 = scmp.eq.s32.totalorder %s17, 0
      %p166 = por %p164, %p165
      %p167 = scmp.ne.s32.totalorder %s159, %s161
      %p168 = scmp.eq.s32.totalorder %s22, 1
      %p169 = por %p167, %p168
      %p170 = scmp.ne.s32.totalorder %s161, %s162
      %p171 = scmp.eq.s32.totalorder %s22, 0
      %p172 = por %p170, %p171
      %p173 = scmp.ne.s32.totalorder %s161, %s162
      %p174 = scmp.eq.s32.totalorder %s23, 1
      %p175 = por %p173, %p174
      %p177 = scmp.ne.s32.totalorder %s162, %s176
      %p178 = scmp.eq.s32.totalorder %s23, 0
      %p179 = por %p177, %p178
      %s181 = sadd.s32 %s180, 1
      %p184 = scmp.eq.s32.totalorder %s17, 1
      %p185 = scmp.ne.s32.totalorder %s180, %s182
      %p186 = scmp.eq.s32.totalorder %s17, 0
      %p187 = por %p185, %p186
      %p188 = scmp.ne.s32.totalorder %s180, %s182
      %p189 = scmp.eq.s32.totalorder %s22, 1
      %p190 = por %p188, %p189
      %p191 = scmp.ne.s32.totalorder %s182, %s183
      %p192 = scmp.eq.s32.totalorder %s22, 0
      %p193 = por %p191, %p192
      %p194 = scmp.ne.s32.totalorder %s182, %s183
      %p195 = scmp.eq.s32.totalorder %s23, 1
      %p196 = por %p194, %p195
      %p198 = scmp.ne.s32.totalorder %s183, %s197
      %p199 = scmp.eq.s32.totalorder %s23, 0
      %p200 = por %p198, %p199
      %s201 = ssub.s32 %s24, %s36
      %s202 = ssub.s32 %s25, %s32
      %s203 = sor.u32 %s201, %s202
      %p204 = scmp.eq.s32.totalorder %s203, 0
      %s206 = sadd.s32 %s205, 1
      %s207 = scalar_select %p204, %s205, %s206
      %p210 = pneg %p204
      %p211 = scmp.eq.s32.totalorder %s17, 1
      %p212 = por %p210, %p211
      %p213 = scmp.ne.s32.totalorder %s205, %s208
      %p214 = scmp.eq.s32.totalorder %s17, 0
      %p215 = por %p213, %p214
      %p216 = scmp.ne.s32.totalorder %s205, %s208
      %p217 = scmp.eq.s32.totalorder %s22, 1
      %p218 = por %p216, %p217
      %p219 = scmp.ne.s32.totalorder %s208, %s209
      %p220 = scmp.eq.s32.totalorder %s22, 0
      %p221 = por %p219, %p220
      %p222 = scmp.ne.s32.totalorder %s208, %s209
      %p223 = scmp.eq.s32.totalorder %s23, 1
      %p224 = por %p222, %p223
      %p226 = scmp.ne.s32.totalorder %s209, %s225
      %p227 = scmp.eq.s32.totalorder %s23, 0
      %p228 = por %p226, %p227
      %p229 = scmp.le.s32.totalorder 1, %s17
      %p230 = scmp.lt.s32.totalorder %s17, 3
      %p231 = pnand %p229, %p230
      %p232 = pneg %p231
      // Predicated region
      $region9: #{_lambda_.1} parent=5 // pred_check
        _
      $region10: #{_lambda_.1} parent=5 // pred_check_branch
        %234 = sbr.rel (%p231) target = $region12
      $region11: #{_lambda_.1} parent=5 // pred_region
        %s235 = ssub.s32 %s17, 1
        // Predicated region
        $region13: #{_lambda_.1} parent=11 // pred_check
          %p236 = pneg %p50
        $region14: #{_lambda_.1} parent=11 // pred_check_branch
          %238 = sbr.rel (%p236) target = $region16
        $region15: #{_lambda_.1} parent=11 // pred_region
          %s240 = ssub.s32 16, 16
          %241 = vsyncadd [#allocation4], %s240
          %s243 = sshll.u32 %s0, 4
          %s244 = int_to_ptr.vmem [resolvable:$true] %s243
          %246 = dma.vmem_to_smem %s244, 16, [#allocation2], [#allocation4]
        $region16: #{_lambda_.1} parent=11 // pred_fallthru
          _
        // Predicated region
        $region17: #{_lambda_.1} parent=11 // pred_check
          %p247 = pneg %p151
        $region18: #{_lambda_.1} parent=11 // pred_check_branch
          %249 = sbr.rel (%p247) target = $region20
        $region19: #{_lambda_.1} parent=11 // pred_region
          _
        $region20: #{_lambda_.1} parent=11 // pred_fallthru
          _
        // Predicated region
        $region21: #{_lambda_.1} parent=11 // pred_check
          %p250 = pneg %p172
        $region22: #{_lambda_.1} parent=11 // pred_check_branch
          %252 = sbr.rel (%p250) target = $region24
        $region23: #{_lambda_.1} parent=11 // pred_region
          _
        $region24: #{_lambda_.1} parent=11 // pred_fallthru
          _
        // Predicated region
        $region25: #{_lambda_.1} parent=11 // pred_check
          %p253 = pneg %p193
        $region26: #{_lambda_.1} parent=11 // pred_check_branch
          %255 = sbr.rel (%p253) target = $region28
        $region27: #{_lambda_.1} parent=11 // pred_region
          _
        $region28: #{_lambda_.1} parent=11 // pred_fallthru
          _
      $region12: #{_lambda_.1} parent=5 // pred_fallthru
        _
      %p256 = scmp.lt.s32.totalorder %s17, 2
      // Predicated region
      $region29: #{_lambda_.1} parent=5 // pred_check
        %p257 = pneg %p256
      $region30: #{_lambda_.1} parent=5 // pred_check_branch
        %259 = sbr.rel (%p257) target = $region32
      $region31: #{_lambda_.1} parent=5 // pred_region
        // Predicated region
        $region33: #{_lambda_.1} parent=31 // pred_check
          %p260 = pneg %p72
        $region34: #{_lambda_.1} parent=31 // pred_check_branch
          %262 = sbr.rel (%p260) target = $region36
        $region35: #{_lambda_.1} parent=31 // pred_region
          %s263 = smul.u32 2, %s24
          %s264 = smul.u32 2, %s25
          %p265 = scmp.lt.s32.totalorder %s263, 3
          %s266 = scalar_select %p265, %s263, 3
          %p267 = scmp.lt.s32.totalorder %s264, 1
          %s268 = scalar_select %p267, %s264, 1
          %s269 = smul.addr %s266, 2
          %s270 = sadd.s32 %s268, %s269
          %s271 = smul.addr %s270, 4
          %s272 = scalar_lea.vmem %s1, %s271
          %s273 = smul.u32 2, %s24
          %s274 = smul.u32 2, %s25
        $region36: #{_lambda_.1} parent=31 // pred_fallthru
          _
        // Predicated region
        $region37: #{_lambda_.1} parent=31 // pred_check
          %p275 = pneg %p98
        $region38: #{_lambda_.1} parent=31 // pred_check_branch
          %277 = sbr.rel (%p275) target = $region40
        $region39: #{_lambda_.1} parent=31 // pred_region
          %s278 = smul.u32 2, %s24
          %p279 = scmp.lt.s32.totalorder %s278, 3
          %s280 = scalar_select %p279, %s278, 3
          %s281 = scalar_lea.vmem %s2, %s280
          %s282 = smul.u32 2, %s24
        $region40: #{_lambda_.1} parent=31 // pred_fallthru
          _
        // Predicated region
        $region41: #{_lambda_.1} parent=31 // pred_check
          %p283 = pneg %p124
        $region42: #{_lambda_.1} parent=31 // pred_check_branch
          %285 = sbr.rel (%p283) target = $region44
        $region43: #{_lambda_.1} parent=31 // pred_region
          %s286 = smul.u32 2, %s24
          %p287 = scmp.lt.s32.totalorder %s286, 3
          %s288 = scalar_select %p287, %s286, 3
          %s289 = scalar_lea.vmem %s3, %s288
          %s290 = smul.u32 2, %s24
        $region44: #{_lambda_.1} parent=31 // pred_fallthru
          _
      $region32: #{_lambda_.1} parent=5 // pred_fallthru
        _
      %p291 = scmp.le.s32.totalorder 1, %s17
      %p292 = scmp.lt.s32.totalorder %s17, 3
      %p293 = pnand %p291, %p292
      %p294 = pneg %p293
      // Predicated region
      $region45: #{_lambda_.1} parent=5 // pred_check
        _
      $region46: #{_lambda_.1} parent=5 // pred_check_branch
        %296 = sbr.rel (%p293) target = $region48
      $region47: #{_lambda_.1} parent=5 // pred_region
        %s297 = ssub.s32 %s17, 1
        // Predicated region
        $region49: #{_lambda_.1} parent=47 // pred_check
          %p298 = pneg %p50
        $region50: #{_lambda_.1} parent=47 // pred_check_branch
          %300 = sbr.rel (%p298) target = $region52
        $region51: #{_lambda_.1} parent=47 // pred_region
          %301 = dma.done [#allocation4], 16
        $region52: #{_lambda_.1} parent=47 // pred_fallthru
          _
        %302 = sfence
        %p303 = pneg %p50
        %p304 = pneg %p47
        %s305 = smul.u32 2, %s26
        %s306 = smul.u32 2, %s27
        %p307 = scmp.lt.s32.totalorder %s305, 3
        %s308 = scalar_select %p307, %s305, 3
        %p309 = scmp.lt.s32.totalorder %s306, 1
        %s310 = scalar_select %p309, %s306, 1
        %s311 = smul.addr %s308, 2
        %s312 = sadd.s32 %s310, %s311
        %s313 = smul.addr %s312, 4
        %s314 = scalar_lea.vmem %s1, %s313
        %p315 = pneg %p78
        %p316 = pneg %p75
        %s317 = smul.u32 2, %s26
        %p318 = scmp.lt.s32.totalorder %s317, 3
        %s319 = scalar_select %p318, %s317, 3
        %s320 = scalar_lea.vmem %s2, %s319
        %p321 = pneg %p104
        %p322 = pneg %p101
        %s323 = smul.u32 2, %s26
        %p324 = scmp.lt.s32.totalorder %s323, 3
        %s325 = scalar_select %p324, %s323, 3
        %s326 = scalar_lea.vmem %s3, %s325
        %p327 = pneg %p130
        %p328 = pneg %p127
        %p329 = pneg %p151
        %p330 = pneg %p148
        %p331 = pneg %p172
        %p332 = pneg %p169
        %p333 = pneg %p193
        %p334 = pneg %p190
        %p335 = pneg %p221
        %p336 = pneg %p218
        %s337 = sand.u32 %s208, 1
        %s338 = scalar_lea.sflag [#allocation3], %s337
        %s339 = sand.u32 %s208, 1
        %s340 = smul.addr %s339, 16
        %s341 = scalar_lea.vmem [#allocation5], %s340
        %s342 = smul.u32 2, %s26
        %s343 = smul.u32 2, %s27
        %p344 = scmp.lt.s32.totalorder %s342, 3
        %s345 = scalar_select %p344, %s342, 3
        %p346 = scmp.lt.s32.totalorder %s343, 1
        %s347 = scalar_select %p346, %s343, 1
        %s348 = smul.addr %s345, 2
        %s349 = sadd.s32 %s347, %s348
        %s350 = smul.addr %s349, 4
        %s351 = scalar_lea.vmem %s1, %s350
        %s352 = smul.u32 2, %s26
        %s353 = smul.u32 2, %s27
        %s354 = smul.u32 2, %s26
        %p355 = scmp.lt.s32.totalorder %s354, 3
        %s356 = scalar_select %p355, %s354, 3
        %s357 = scalar_lea.vmem %s2, %s356
        %s358 = smul.u32 2, %s26
        %s359 = smul.u32 2, %s26
        %p360 = scmp.lt.s32.totalorder %s359, 3
        %s361 = scalar_select %p360, %s359, 3
        %s362 = scalar_lea.vmem %s3, %s361
        %s363 = smul.u32 2, %s26
        %s364 = smul.u32 2, %s26
        %s365 = smul.u32 2, %s27
        %s367 = sld [smem:[#allocation2]]
        %s368 = sld [smem:[#allocation2 + $0x1]]
        %v369 = vld [vmem:[%s351] sm:$0xf]
        %v370 = vld [vmem:[%s351 + $0x4] sm:$0xf]
        %v371 = vld [vmem:[%s351 + $0x8] sm:$0xf]
        %v372 = vld [vmem:[%s351 + $0xc] sm:$0xf]
        %v373 = vld [vmem:[%s4] sm:$0xf]
        %v374 = vld [vmem:[%s4 + $0x4] sm:$0xf]
        %v375 = vld [vmem:[%s4 + $0x8] sm:$0xf]
        %v376 = vld [vmem:[%s4 + $0xc] sm:$0xf]
        %v377 = vld [vmem:[%s4 + $0x10] sm:$0xf]
        %v378 = vld [vmem:[%s4 + $0x14] sm:$0xf]
        %v379 = vld [vmem:[%s4 + $0x18] sm:$0xf]
        %v380 = vld [vmem:[%s4 + $0x1c] sm:$0xf]
        %v381 = vld [vmem:[%s4 + $0x20] sm:$0xf]
        %v382 = vld [vmem:[%s4 + $0x24] sm:$0xf]
        %v383 = vld [vmem:[%s4 + $0x28] sm:$0xf]
        %v384 = vld [vmem:[%s4 + $0x2c] sm:$0xf]
        %v385 = vld [vmem:[%s4 + $0x30] sm:$0xf]
        %v386 = vld [vmem:[%s4 + $0x34] sm:$0xf]
        %v387 = vld [vmem:[%s4 + $0x38] sm:$0xf]
        %v388 = vld [vmem:[%s4 + $0x3c] sm:$0xf]
        %v393 = vunpack.c.l.b16 %v369
        %v394 = vunpack.c.l.b16 %v370
        %v395 = vunpack.c.l.b16 %v371
        %v396 = vunpack.c.l.b16 %v372
        %v397 = vpack.c.b16 %v394, %v393
        %v398 = vpack.c.b16 %v396, %v395
        %v417 = vunpack.c.l.b16 %v373
        %v418 = vunpack.c.l.b16 %v374
        %v419 = vunpack.c.l.b16 %v375
        %v420 = vunpack.c.l.b16 %v376
        %v421 = vunpack.c.l.b16 %v377
        %v422 = vunpack.c.l.b16 %v378
        %v423 = vunpack.c.l.b16 %v379
        %v424 = vunpack.c.l.b16 %v380
        %v425 = vunpack.c.l.b16 %v381
        %v426 = vunpack.c.l.b16 %v382
        %v427 = vunpack.c.l.b16 %v383
        %v428 = vunpack.c.l.b16 %v384
        %v429 = vunpack.c.l.b16 %v385
        %v430 = vunpack.c.l.b16 %v386
        %v431 = vunpack.c.l.b16 %v387
        %v432 = vunpack.c.l.b16 %v388
        %v433 = vpack.c.b16 %v418, %v417
        %v434 = vpack.c.b16 %v420, %v419
        %v435 = vpack.c.b16 %v422, %v421
        %v436 = vpack.c.b16 %v424, %v423
        %v437 = vpack.c.b16 %v426, %v425
        %v438 = vpack.c.b16 %v428, %v427
        %v439 = vpack.c.b16 %v430, %v429
        %v440 = vpack.c.b16 %v432, %v431
        %449 = vmatprep.subr.bf16.mxu0 0
        %450 = vmatpush1.bf16.msra.mxu0 %v440
        %451 = vmatprep.subr.bf16.mxu0 0
        %452 = vmatpush1.bf16.msra.mxu0 %v439
        %453 = vmatprep.subr.bf16.mxu0 0
        %454 = vmatpush1.bf16.msra.mxu0 %v438
        %455 = vmatprep.subr.bf16.mxu0 0
        %456 = vmatpush1.bf16.msra.mxu0 %v437
        %457 = vmatprep.subr.bf16.mxu0 0
        %458 = vmatpush1.bf16.msra.mxu0 %v436
        %459 = vmatprep.subr.bf16.mxu0 0
        %460 = vmatpush1.bf16.msra.mxu0 %v435
        %461 = vmatprep.subr.bf16.mxu0 0
        %462 = vmatpush1.bf16.msra.mxu0 %v434
        %463 = vmatprep.subr.bf16.mxu0 0
        %464 = vmatpush1.bf16.msra.mxu0 %v433
        %465 = vmatprep.subr.bf16.mxu0 0
        %466 = vmatpush2.bf16.msra.mxu0 0
        %467 = vmatprep.subr.bf16.mxu0 0
        %468 = vmatpush2.bf16.msra.mxu0 0
        %469 = vmatprep.subr.bf16.mxu0 0
        %470 = vmatpush2.bf16.msra.mxu0 0
        %471 = vmatprep.subr.bf16.mxu0 0
        %472 = vmatpush2.bf16.msra.mxu0 0
        %473 = vmatprep.subr.bf16.mxu0 0
        %474 = vmatpush2.bf16.msra.mxu0 0
        %475 = vmatprep.subr.bf16.mxu0 0
        %476 = vmatpush2.bf16.msra.mxu0 0
        %477 = vmatprep.subr.bf16.mxu0 0
        %478 = vmatpush2.bf16.msra.mxu0 0
        %479 = vmatprep.subr.bf16.mxu0 0
        %480 = vmatpush2.bf16.msra.mxu0 0
        %481 = vmatprep.mubr.bf16.mxu0 0
        %482 = vmatmul.mubr.bf16.gmra.mxu0 %v397
        %v483 = vpop.f32.mrf.mxu0
        %v484 = vadd.f32 0.0, %v483
        %v485 = vpop.f32.mrf.mxu0
        %v486 = vpop.f32.mrf.mxu0
        %v487 = vadd.f32 0.0, %v486
        %v488 = vpop.f32.mrf.mxu0
        %489 = vmatprep.mubr.bf16.mxu0 0
        %490 = vmatmul.mubr.bf16.gmra.mxu0 %v398
        %v491 = vpop.f32.mrf.mxu0
        %v492 = vadd.f32 0.0, %v491
        %v493 = vpop.f32.mrf.mxu0
        %v494 = vpop.f32.mrf.mxu0
        %v495 = vadd.f32 0.0, %v494
        %v496 = vpop.f32.mrf.mxu0
        %497 = vdwg.mxu0
        %v498 = vld [vmem:[%s357] sm:$0x1]
        %v499 = vld [vmem:[%s357 + $0x1] sm:$0x1]
        %v502 = vlaneseq
        %v503 = vshrl.u32 %v502, 7
        %v504 = vsub.s32 0, %v503
        %v505 = vrot.slane %v498, %v504
        %v506 = vlaneseq
        %v507 = vshrl.u32 %v506, 7
        %v508 = vsub.s32 0, %v507
        %v509 = vrot.slane %v499, %v508
        %v512 = vadd.f32 %v484, %v505
        %v513 = vadd.f32 %v487, %v505
        %v514 = vadd.f32 %v492, %v509
        %v515 = vadd.f32 %v495, %v509
        %v516 = vld [vmem:[%s362] sm:$0x1]
        %v517 = vld [vmem:[%s362 + $0x1] sm:$0x1]
        %v520 = vlaneseq
        %v521 = vshrl.u32 %v520, 7
        %v522 = vsub.s32 0, %v521
        %v523 = vrot.slane %v516, %v522
        %v524 = vlaneseq
        %v525 = vshrl.u32 %v524, 7
        %v526 = vsub.s32 0, %v525
        %v527 = vrot.slane %v517, %v526
        %v530 = vadd.f32 %v512, %v523
        %v531 = vadd.f32 %v513, %v523
        %v532 = vadd.f32 %v514, %v527
        %v533 = vadd.f32 %v515, %v527
        %v534 = vmul.f32 %v512, %v512
        %v535 = vmul.f32 %v513, %v513
        %v536 = vmul.f32 %v514, %v514
        %v537 = vmul.f32 %v515, %v515
        %v538 = vmul.f32 %v512, %v534
        %v539 = vmul.f32 %v513, %v535
        %v540 = vmul.f32 %v514, %v536
        %v541 = vmul.f32 %v515, %v537
        %v542 = vmul.f32 %v538, 0.044715
        %v543 = vmul.f32 %v539, 0.044715
        %v544 = vmul.f32 %v540, 0.044715
        %v545 = vmul.f32 %v541, 0.044715
        %v546 = vadd.f32 %v512, %v542
        %v547 = vadd.f32 %v513, %v543
        %v548 = vadd.f32 %v514, %v544
        %v549 = vadd.f32 %v515, %v545
        %v550 = vmul.f32 %v546, 0.7978846
        %v551 = vmul.f32 %v547, 0.7978846
        %v552 = vmul.f32 %v548, 0.7978846
        %v553 = vmul.f32 %v549, 0.7978846
        %v554 = vtanh.pop %v550
        %v555 = vtanh.pop %v551
        %v556 = vtanh.pop %v552
        %v557 = vtanh.pop %v553
        %v558 = vadd.f32 %v554, 1.0
        %v559 = vadd.f32 %v555, 1.0
        %v560 = vadd.f32 %v556, 1.0
        %v561 = vadd.f32 %v557, 1.0
        %v562 = vmul.f32 %v558, 0.5
        %v563 = vmul.f32 %v559, 0.5
        %v564 = vmul.f32 %v560, 0.5
        %v565 = vmul.f32 %v561, 0.5
        %v566 = vmul.f32 %v512, %v562
        %v567 = vmul.f32 %v513, %v563
        %v568 = vmul.f32 %v514, %v564
        %v569 = vmul.f32 %v515, %v565
        %v570 = vmul.f32 %v530, %v530
        %v571 = vmul.f32 %v531, %v531
        %v572 = vmul.f32 %v532, %v532
        %v573 = vmul.f32 %v533, %v533
        %v574 = vmul.f32 %v530, %v570
        %v575 = vmul.f32 %v531, %v571
        %v576 = vmul.f32 %v532, %v572
        %v577 = vmul.f32 %v533, %v573
        %v578 = vmul.f32 %v574, 0.044715
        %v579 = vmul.f32 %v575, 0.044715
        %v580 = vmul.f32 %v576, 0.044715
        %v581 = vmul.f32 %v577, 0.044715
        %v582 = vadd.f32 %v530, %v578
        %v583 = vadd.f32 %v531, %v579
        %v584 = vadd.f32 %v532, %v580
        %v585 = vadd.f32 %v533, %v581
        %v586 = vmul.f32 %v582, 0.7978846
        %v587 = vmul.f32 %v583, 0.7978846
        %v588 = vmul.f32 %v584, 0.7978846
        %v589 = vmul.f32 %v585, 0.7978846
        %v590 = vtanh.pop %v586
        %v591 = vtanh.pop %v587
        %v592 = vtanh.pop %v588
        %v593 = vtanh.pop %v589
        %v594 = vadd.f32 %v590, 1.0
        %v595 = vadd.f32 %v591, 1.0
        %v596 = vadd.f32 %v592, 1.0
        %v597 = vadd.f32 %v593, 1.0
        %v598 = vmul.f32 %v594, 0.5
        %v599 = vmul.f32 %v595, 0.5
        %v600 = vmul.f32 %v596, 0.5
        %v601 = vmul.f32 %v597, 0.5
        %v602 = vmul.f32 %v530, %v598
        %v603 = vmul.f32 %v531, %v599
        %v604 = vmul.f32 %v532, %v600
        %v605 = vmul.f32 %v533, %v601
        %v606 = vstv %s367
        %v607 = vmul.f32 %v602, %v606
        %v608 = vmul.f32 %v603, %v606
        %v609 = vmul.f32 %v604, %v606
        %v610 = vmul.f32 %v605, %v606
        %v611 = vstv %s368
        %v612 = vmul.f32 %v566, %v611
        %v613 = vmul.f32 %v567, %v611
        %v614 = vmul.f32 %v568, %v611
        %v615 = vmul.f32 %v569, %v611
        %v616 = vadd.f32 %v607, %v612
        %v617 = vadd.f32 %v608, %v613
        %v618 = vadd.f32 %v609, %v614
        %v619 = vadd.f32 %v610, %v615
        %v620 = vpack.c.bf16 %v617, %v616
        %v621 = vpack.c.bf16 %v619, %v618
        %v622 = vld [vmem:[%s5] sm:$0xf]
        %v623 = vld [vmem:[%s5 + $0x4] sm:$0xf]
        %v624 = vld [vmem:[%s5 + $0x8] sm:$0xf]
        %v625 = vld [vmem:[%s5 + $0xc] sm:$0xf]
        %v626 = vld [vmem:[%s5 + $0x10] sm:$0xf]
        %v627 = vld [vmem:[%s5 + $0x14] sm:$0xf]
        %v628 = vld [vmem:[%s5 + $0x18] sm:$0xf]
        %v629 = vld [vmem:[%s5 + $0x1c] sm:$0xf]
        %v630 = vld [vmem:[%s5 + $0x20] sm:$0xf]
        %v631 = vld [vmem:[%s5 + $0x24] sm:$0xf]
        %v632 = vld [vmem:[%s5 + $0x28] sm:$0xf]
        %v633 = vld [vmem:[%s5 + $0x2c] sm:$0xf]
        %v634 = vld [vmem:[%s5 + $0x30] sm:$0xf]
        %v635 = vld [vmem:[%s5 + $0x34] sm:$0xf]
        %v636 = vld [vmem:[%s5 + $0x38] sm:$0xf]
        %v637 = vld [vmem:[%s5 + $0x3c] sm:$0xf]
        %v654 = vunpack.c.l.b16 %v622
        %v655 = vunpack.c.l.b16 %v623
        %v656 = vunpack.c.l.b16 %v624
        %v657 = vunpack.c.l.b16 %v625
        %v658 = vunpack.c.l.b16 %v626
        %v659 = vunpack.c.l.b16 %v627
        %v660 = vunpack.c.l.b16 %v628
        %v661 = vunpack.c.l.b16 %v629
        %v662 = vunpack.c.l.b16 %v630
        %v663 = vunpack.c.l.b16 %v631
        %v664 = vunpack.c.l.b16 %v632
        %v665 = vunpack.c.l.b16 %v633
        %v666 = vunpack.c.l.b16 %v634
        %v667 = vunpack.c.l.b16 %v635
        %v668 = vunpack.c.l.b16 %v636
        %v669 = vunpack.c.l.b16 %v637
        %v670 = vpack.c.b16 %v655, %v654
        %v671 = vpack.c.b16 %v657, %v656
        %v672 = vpack.c.b16 %v659, %v658
        %v673 = vpack.c.b16 %v661, %v660
        %v674 = vpack.c.b16 %v663, %v662
        %v675 = vpack.c.b16 %v665, %v664
        %v676 = vpack.c.b16 %v667, %v666
        %v677 = vpack.c.b16 %v669, %v668
        %686 = vmatprep.subr.bf16.mxu0 0
        %687 = vmatpush1.bf16.msra.mxu0 %v677
        %688 = vmatprep.subr.bf16.mxu0 0
        %689 = vmatpush1.bf16.msra.mxu0 %v676
        %690 = vmatprep.subr.bf16.mxu0 0
        %691 = vmatpush1.bf16.msra.mxu0 %v675
        %692 = vmatprep.subr.bf16.mxu0 0
        %693 = vmatpush1.bf16.msra.mxu0 %v674
        %694 = vmatprep.subr.bf16.mxu0 0
        %695 = vmatpush1.bf16.msra.mxu0 %v673
        %696 = vmatprep.subr.bf16.mxu0 0
        %697 = vmatpush1.bf16.msra.mxu0 %v672
        %698 = vmatprep.subr.bf16.mxu0 0
        %699 = vmatpush1.bf16.msra.mxu0 %v671
        %700 = vmatprep.subr.bf16.mxu0 0
        %701 = vmatpush1.bf16.msra.mxu0 %v670
        %702 = vmatprep.subr.bf16.mxu0 0
        %703 = vmatpush2.bf16.msra.mxu0 0
        %704 = vmatprep.subr.bf16.mxu0 0
        %705 = vmatpush2.bf16.msra.mxu0 0
        %706 = vmatprep.subr.bf16.mxu0 0
        %707 = vmatpush2.bf16.msra.mxu0 0
        %708 = vmatprep.subr.bf16.mxu0 0
        %709 = vmatpush2.bf16.msra.mxu0 0
        %710 = vmatprep.subr.bf16.mxu0 0
        %711 = vmatpush2.bf16.msra.mxu0 0
        %712 = vmatprep.subr.bf16.mxu0 0
        %713 = vmatpush2.bf16.msra.mxu0 0
        %714 = vmatprep.subr.bf16.mxu0 0
        %715 = vmatpush2.bf16.msra.mxu0 0
        %716 = vmatprep.subr.bf16.mxu0 0
        %717 = vmatpush2.bf16.msra.mxu0 0
        %718 = vmatprep.mubr.bf16.mxu0 0
        %719 = vmatmul.mubr.bf16.gmra.mxu0 %v620
        %v720 = vpop.f32.mrf.mxu0
        %v721 = vadd.f32 0.0, %v720
        %v722 = vpop.f32.mrf.mxu0
        %v723 = vpop.f32.mrf.mxu0
        %v724 = vadd.f32 0.0, %v723
        %v725 = vpop.f32.mrf.mxu0
        %726 = vmatprep.mubr.bf16.mxu0 0
        %727 = vmatmul.mubr.bf16.gmra.mxu0 %v621
        %v728 = vpop.f32.mrf.mxu0
        %v729 = vadd.f32 0.0, %v728
        %v730 = vpop.f32.mrf.mxu0
        %v731 = vpop.f32.mrf.mxu0
        %v732 = vadd.f32 0.0, %v731
        %v733 = vpop.f32.mrf.mxu0
        %734 = vdwg.mxu0
        %v735 = vld [vmem:[%s6] sm:$0x1]
        %v737 = vlaneseq
        %v738 = vshrl.u32 %v737, 7
        %v739 = vsub.s32 0, %v738
        %v740 = vrot.slane %v735, %v739
        %v742 = vadd.f32 %v721, %v740
        %v743 = vadd.f32 %v724, %v740
        %v744 = vadd.f32 %v729, %v740
        %v745 = vadd.f32 %v732, %v740
        %v746 = vpack.c.bf16 %v743, %v742
        %v747 = vpack.c.bf16 %v745, %v744
        %v750 = vunpack.c.l.b16 %v746
        %v751 = vunpack.c.h.b16 %v746
        %v752 = vunpack.c.l.b16 %v747
        %v753 = vunpack.c.h.b16 %v747
        %v754 = vpack.c.b16 %v750, %v750
        %v755 = vpack.c.b16 %v751, %v751
        %v756 = vpack.c.b16 %v752, %v752
        %v757 = vpack.c.b16 %v753, %v753
        %762 = vst [vmem:[%s341] sm:$0xf] %v754
        %763 = vst [vmem:[%s341 + $0x4] sm:$0xf] %v755
        %764 = vst [vmem:[%s341 + $0x8] sm:$0xf] %v756
        %765 = vst [vmem:[%s341 + $0xc] sm:$0xf] %v757
        %s766 = sand.u32 %s208, 1
        %s767 = scalar_lea.sflag [#allocation3], %s766
        %s768 = sand.u32 %s208, 1
        %s769 = smul.addr %s768, 16
        %s770 = scalar_lea.vmem [#allocation5], %s769
        // Predicated region
        $region53: #{_lambda_.1} parent=47 // pred_check
          %p771 = pneg %p218
        $region54: #{_lambda_.1} parent=47 // pred_check_branch
          %773 = sbr.rel (%p771) target = $region56
        $region55: #{_lambda_.1} parent=47 // pred_region
          %s774 = smul.u32 2, %s26
          %s775 = smul.u32 2, %s27
          %s777 = ssub.s32 256, 256
          %778 = vsyncadd %s767, %s777
          %s779 = smul.addr %s774, 2
          %s780 = sadd.s32 %s775, %s779
          %s781 = smul.addr %s780, 64
          %s782 = scalar_lea.hbm %s7, %s781
          %s783 = sshll.u32 %s770, 4
          %s784 = int_to_ptr.vmem [resolvable:$true] %s783
          %789 = dma.vmem_to_hbm [thread:$0]  %s784, 256, %s782, %s767, 64, 64, 4
        $region56: #{_lambda_.1} parent=47 // pred_fallthru
          _
      $region48: #{_lambda_.1} parent=5 // pred_fallthru
        _
      %p790 = scmp.le.s32.totalorder 2, %s17
      // Predicated region
      $region57: #{_lambda_.1} parent=5 // pred_check
        %p791 = pneg %p790
      $region58: #{_lambda_.1} parent=5 // pred_check_branch
        %793 = sbr.rel (%p791) target = $region60
      $region59: #{_lambda_.1} parent=5 // pred_region
        %s794 = ssub.s32 %s17, 2
        // Predicated region
        $region61: #{_lambda_.1} parent=59 // pred_check
          %p795 = pneg %p224
        $region62: #{_lambda_.1} parent=59 // pred_check_branch
          %797 = sbr.rel (%p795) target = $region64
        $region63: #{_lambda_.1} parent=59 // pred_region
          %s798 = sand.u32 %s209, 1
          %s799 = scalar_lea.sflag [#allocation3], %s798
          %s800 = sand.u32 %s209, 1
          %s801 = smul.addr %s800, 16
          %s802 = scalar_lea.vmem [#allocation5], %s801
          %803 = dma.done %s799, 256
        $region64: #{_lambda_.1} parent=59 // pred_fallthru
          _
      $region60: #{_lambda_.1} parent=5 // pred_fallthru
        _
    $region6: #{_lambda_.1} parent=1 // loop_footer
      %s21 = sadd.s32 1, %s17
    $region7: #{_lambda_.1} parent=1 // loop_footer_branch
      %16 = sbr.rel target = $region3
    $region8: #{_lambda_.1} parent=1 // loop_exit
      _
    %804 = vsyncpa [#allocation3], 1
    %s805 = scalar_lea.sflag [#allocation3], 1
    %806 = vsyncpa %s805, 1
    %807 = vsyncpa [#allocation4], 1
    %s808 = scalar_lea.sflag [#allocation4], 1
    %809 = vsyncpa %s808, 1

</llo_original>
